<compile_context>
chip_gen: v5e
topology: v5e:2x2
jax: 0.10.0
libtpu: 0.0.40
codegen_flags: <defaults>
</compile_context>

<pallas_src>
import jax
import jax.numpy as jnp
from jax.experimental import pallas as pl
from jax.experimental.pallas import tpu as pltpu


def _mlp_kernel(x_ref, wgu_ref, wd_ref, o_ref, acc_ref):
    # x_ref:   (tm, H)       token tile (block index constant across k -> resident)
    # wgu_ref: (H, 2*tI)     [gate slab | up slab] for this k-block (streamed)
    # wd_ref:  (tI, H)       down_proj slab for this k-block (streamed)
    # o_ref:   (tm, H)       output tile
    # acc_ref: (tm, H) f32   VMEM accumulator over the I (k) axis
    k = pl.program_id(1)
    ti = wd_ref.shape[0]

    @pl.when(k == 0)
    def _():
        acc_ref[...] = jnp.zeros_like(acc_ref)

    # One fused matmul for gate+up; native-dtype operands, f32 accumulation.
    gu = jnp.dot(x_ref[...], wgu_ref[...], preferred_element_type=jnp.float32)
    gate = gu[:, :ti]
    up = gu[:, ti:]
    h = gate * jax.nn.sigmoid(gate) * up          # silu(gate) * up in f32 (VPU/EUP)

    # Down-projection partial sum; h cast back to the weight dtype so the MXU
    # stays on its fast (e.g. bf16) path, accumulate in f32.
    acc_ref[...] += jnp.dot(h.astype(wd_ref.dtype), wd_ref[...],
                            preferred_element_type=jnp.float32)

    @pl.when(k == pl.num_programs(1) - 1)
    def _():
        o_ref[...] = acc_ref[...].astype(o_ref.dtype)


def _round_up(a, b):
    return ((a + b - 1) // b) * b


def mix_qwen2_mlp(x, w_gate, w_up, w_down, *, tm=256, ti=512):
    """Fused Qwen2 MLP: (silu(x @ w_gate) * (x @ w_up)) @ w_down.

    x: (M, H); w_gate/w_up: (H, I); w_down: (I, H) -> (M, H).
    """
    M, H = x.shape
    I = w_gate.shape[1]
    out_dtype = x.dtype
    w_dtype = w_gate.dtype

    # --- tile sizes --------------------------------------------------------
    tm = min(tm, _round_up(M, 8))        # sublane axis must stay a multiple of 8
    ti = min(ti, I)

    m_pad = _round_up(M, tm)
    i_pad = _round_up(I, ti)
    nk = i_pad // ti

    # --- pad / pack operands (one-time weight prep, done outside the kernel) -
    if m_pad != M:
        x = jnp.pad(x, ((0, m_pad - M), (0, 0)))
    if i_pad != I:
        w_gate = jnp.pad(w_gate, ((0, 0), (0, i_pad - I)))
        w_up = jnp.pad(w_up, ((0, 0), (0, i_pad - I)))
        w_down = jnp.pad(w_down, ((0, i_pad - I), (0, 0)))
    # k-block of width 2*ti holds [gate slab k | up slab k].
    w_gu = jnp.concatenate(
        [w_gate.reshape(H, nk, ti), w_up.reshape(H, nk, ti)], axis=2
    ).reshape(H, nk * 2 * ti)

    # --- VMEM budget: double-buffered streamed blocks + resident accumulator -
    x_bytes = jnp.dtype(out_dtype).itemsize
    w_bytes = jnp.dtype(w_dtype).itemsize
    vmem = 2 * (tm * H * x_bytes             # x tile
                + H * 2 * ti * w_bytes       # gate|up slab
                + ti * H * w_bytes           # down slab
                + tm * H * x_bytes)          # out tile
    vmem += tm * H * 4                       # f32 accumulator
    vmem = int(vmem * 1.5) + (2 << 20)
    vmem_limit = min(max(vmem, 16 << 20), 64 << 20)   # safe on v7x's 64 MiB VMEM

    out = pl.pallas_call(
        _mlp_kernel,
        out_shape=jax.ShapeDtypeStruct((m_pad, H), out_dtype),
        grid_spec=pltpu.PrefetchScalarGridSpec(
            num_scalar_prefetch=0,
            grid=(m_pad // tm, nk),          # (tokens: parallel, I-reduction: arbitrary)
            in_specs=[
                pl.BlockSpec((tm, H), lambda i, k: (i, 0)),        # x tile
                pl.BlockSpec((H, 2 * ti), lambda i, k: (0, k)),    # gate|up slab
                pl.BlockSpec((ti, H), lambda i, k: (k, 0)),        # down slab
            ],
            out_specs=pl.BlockSpec((tm, H), lambda i, k: (i, 0)),
            scratch_shapes=[pltpu.VMEM((tm, H), jnp.float32)],
        ),
        compiler_params=pltpu.CompilerParams(
            dimension_semantics=("parallel", "arbitrary"),
            vmem_limit_bytes=vmem_limit,
        ),
    )(x, w_gu, w_down)

    if m_pad != M:
        out = out[:M]
    return out


def mix_qwen2_mlp_ref(x, w_gate, w_up, w_down):
    gate = x @ w_gate
    up = x @ w_up
    return (jax.nn.silu(gate) * up) @ w_down


if __name__ == "__main__":
    key = jax.random.PRNGKey(0)

    # Test 1: small shapes consistent with the module (batch=2, seq=8,
    # hidden=32, intermediate=64) -> single grid step.
    batch, seq, hidden, inter = 2, 8, 32, 64
    kx, kg, ku, kd = jax.random.split(key, 4)
    x = jax.random.normal(kx, (batch, seq, hidden), dtype=jnp.float32)
    w_gate = jax.random.normal(kg, (hidden, inter), dtype=jnp.float32) * 0.05
    w_up = jax.random.normal(ku, (hidden, inter), dtype=jnp.float32) * 0.05
    w_down = jax.random.normal(kd, (inter, hidden), dtype=jnp.float32) * 0.05

    x2d = x.reshape(batch * seq, hidden)
    y = mix_qwen2_mlp(x2d, w_gate, w_up, w_down).reshape(batch, seq, hidden)
    jax.block_until_ready(y)
    y_ref = mix_qwen2_mlp_ref(x2d, w_gate, w_up, w_down).reshape(batch, seq, hidden)
    assert jnp.allclose(y, y_ref, atol=1e-5, rtol=1e-5), "mismatch vs reference (test 1)"

    # Test 2: ragged token count + multi-slab reduction over I (exercises
    # M padding, I padding and the k-axis accumulator path).
    M2, H2, I2 = 13, 128, 320
    k2 = jax.random.split(key, 8)
    x2 = jax.random.normal(k2[4], (M2, H2), dtype=jnp.float32)
    wg2 = jax.random.normal(k2[5], (H2, I2), dtype=jnp.float32) * 0.03
    wu2 = jax.random.normal(k2[6], (H2, I2), dtype=jnp.float32) * 0.03
    wd2 = jax.random.normal(k2[7], (I2, H2), dtype=jnp.float32) * 0.03

    y2 = mix_qwen2_mlp(x2, wg2, wu2, wd2, ti=128)
    jax.block_until_ready(y2)
    y2_ref = mix_qwen2_mlp_ref(x2, wg2, wu2, wd2)
    assert jnp.allclose(y2, y2_ref, atol=1e-4, rtol=1e-4), "mismatch vs reference (test 2)"

    print("KERNEL_OK")
</pallas_src>

<mosaic_0001>
module attributes {stable_mosaic.version = 11 : i64} {
  func.func @_mlp_kernel(%arg0: i32, %arg1: i32, %arg2: memref<16x32xf32, #tpu.memory_space<vmem>>, %arg3: memref<32x128xf32, #tpu.memory_space<vmem>>, %arg4: memref<64x32xf32, #tpu.memory_space<vmem>>, %arg5: memref<16x32xf32, #tpu.memory_space<vmem>>, %arg6: memref<16x32xf32, #tpu.memory_space<vmem>>) attributes {dimension_semantics = [#tpu.dimension_semantics<parallel>, #tpu.dimension_semantics<arbitrary>], iteration_bounds = array<i64: 1, 1>, scalar_prefetch = 0 : i64, scratch_operands = 1 : i64, tpu.core_type = #tpu.core_type<tc>, window_params = [{transform_indices = @transform_0, window_bounds = array<i64: 16, 32>}, {transform_indices = @transform_1, window_bounds = array<i64: 32, 128>}, {transform_indices = @transform_2, window_bounds = array<i64: 64, 32>}, {transform_indices = @transform_3, window_bounds = array<i64: 16, 32>}]} {
    %c0_i32 = arith.constant 0 : i32
    %0 = arith.cmpi eq, %arg1, %c0_i32 : i32
    %1 = arith.extui %0 : i1 to i32
    %c0_i32_0 = arith.constant 0 : i32
    %2 = arith.cmpi ne, %1, %c0_i32_0 : i32
    scf.if %2 {
      %cst_14 = arith.constant 0.000000e+00 : f32
      %23 = vector.broadcast %cst_14 : f32 to vector<16x32xf32>
      %c0_15 = arith.constant 0 : index
      %c0_16 = arith.constant 0 : index
      %24 = vector.load %arg6[%c0_15, %c0_16] : memref<16x32xf32, #tpu.memory_space<vmem>>, vector<16x32xf32>
      tpu.vector_store %arg6[%c0_15, %c0_16], %23 {strides = array<i32>} : memref<16x32xf32, #tpu.memory_space<vmem>>, vector<16x32xf32>,
    } else {
    }
    %c0 = arith.constant 0 : index
    %c0_1 = arith.constant 0 : index
    %3 = vector.load %arg2[%c0, %c0_1] : memref<16x32xf32, #tpu.memory_space<vmem>>, vector<16x32xf32>
    %c0_2 = arith.constant 0 : index
    %c0_3 = arith.constant 0 : index
    %4 = vector.load %arg3[%c0_2, %c0_3] : memref<32x128xf32, #tpu.memory_space<vmem>>, vector<32x128xf32>
    %cst = arith.constant dense<0.000000e+00> : vector<16x128xf32>
    %5 = tpu.matmul %3, %4, %cst {dimension_numbers = #tpu.dot_dimension_numbers<[1], [0], [0], [1], [0, 0, 1, 1], [], []>} : vector<16x32xf32>, vector<32x128xf32>, vector<16x128xf32> -> vector<16x128xf32>
    %6 = vector.extract_strided_slice %5 {offsets = [0, 0], sizes = [16, 64], strides = [1, 1]} : vector<16x128xf32> to vector<16x64xf32>
    %7 = vector.extract_strided_slice %5 {offsets = [0, 64], sizes = [16, 64], strides = [1, 1]} : vector<16x128xf32> to vector<16x64xf32>
    %8 = arith.negf %6 : vector<16x64xf32>
    %9 = math.exp %8 : vector<16x64xf32>
    %cst_4 = arith.constant 1.000000e+00 : f32
    %10 = vector.broadcast %cst_4 : f32 to vector<16x64xf32>
    %11 = arith.addf %10, %9 : vector<16x64xf32>
    %12 = arith.divf %10, %11 : vector<16x64xf32>
    %13 = arith.mulf %6, %12 : vector<16x64xf32>
    %14 = arith.mulf %13, %7 : vector<16x64xf32>
    %c0_5 = arith.constant 0 : index
    %c0_6 = arith.constant 0 : index
    %15 = vector.load %arg6[%c0_5, %c0_6] : memref<16x32xf32, #tpu.memory_space<vmem>>, vector<16x32xf32>
    %c0_7 = arith.constant 0 : index
    %c0_8 = arith.constant 0 : index
    %16 = vector.load %arg4[%c0_7, %c0_8] : memref<64x32xf32, #tpu.memory_space<vmem>>, vector<64x32xf32>
    %cst_9 = arith.constant dense<0.000000e+00> : vector<16x32xf32>
    %17 = tpu.matmul %14, %16, %cst_9 {dimension_numbers = #tpu.dot_dimension_numbers<[1], [0], [0], [1], [0, 0, 1, 1], [], []>} : vector<16x64xf32>, vector<64x32xf32>, vector<16x32xf32> -> vector<16x32xf32>
    %18 = arith.addf %15, %17 : vector<16x32xf32>
    %c0_10 = arith.constant 0 : index
    %c0_11 = arith.constant 0 : index
    %19 = vector.load %arg6[%c0_10, %c0_11] : memref<16x32xf32, #tpu.memory_space<vmem>>, vector<16x32xf32>
    tpu.vector_store %arg6[%c0_10, %c0_11], %18 {strides = array<i32>} : memref<16x32xf32, #tpu.memory_space<vmem>>, vector<16x32xf32>,
    %c0_i32_12 = arith.constant 0 : i32
    %20 = arith.cmpi eq, %arg1, %c0_i32_12 : i32
    %21 = arith.extui %20 : i1 to i32
    %c0_i32_13 = arith.constant 0 : i32
    %22 = arith.cmpi ne, %21, %c0_i32_13 : i32
    scf.if %22 {
      %c0_14 = arith.constant 0 : index
      %c0_15 = arith.constant 0 : index
      %23 = vector.load %arg6[%c0_14, %c0_15] : memref<16x32xf32, #tpu.memory_space<vmem>>, vector<16x32xf32>
      %c0_16 = arith.constant 0 : index
      %c0_17 = arith.constant 0 : index
      %24 = vector.load %arg5[%c0_16, %c0_17] : memref<16x32xf32, #tpu.memory_space<vmem>>, vector<16x32xf32>
      tpu.vector_store %arg5[%c0_16, %c0_17], %23 {strides = array<i32>} : memref<16x32xf32, #tpu.memory_space<vmem>>, vector<16x32xf32>,
    } else {
    }
    return
  }
  func.func @transform_0(%arg0: i32, %arg1: i32) -> (i32, i32) {
    %c0_i32 = arith.constant 0 : i32
    %c0_i32_0 = arith.constant 0 : i32
    return %arg0, %c0_i32 : i32, i32
  }
  func.func @transform_1(%arg0: i32, %arg1: i32) -> (i32, i32) {
    %c0_i32 = arith.constant 0 : i32
    %c0_i32_0 = arith.constant 0 : i32
    return %c0_i32, %arg1 : i32, i32
  }
  func.func @transform_2(%arg0: i32, %arg1: i32) -> (i32, i32) {
    %c0_i32 = arith.constant 0 : i32
    %c0_i32_0 = arith.constant 0 : i32
    return %arg1, %c0_i32 : i32, i32
  }
  func.func @transform_3(%arg0: i32, %arg1: i32) -> (i32, i32) {
    %c0_i32 = arith.constant 0 : i32
    %c0_i32_0 = arith.constant 0 : i32
    return %arg0, %c0_i32 : i32, i32
  }
}

</mosaic_0001>

<llo_original>
// kernel: tpu_custom_call.1
$region0: #{tpu_custom_call.1}
  #allocation0 [shape = 'u32[]', space=smem, size = 0x4, offset = 0x4, fixed_abs, tag = 'smem constant byte address 0x4 - core index']
  #allocation1 [shape = 'u32[72,128]{1,0:T(1,128)}', space=vmem, size = 0x9000, scoped, tag = 'internal scratch']
  #allocation2 [shape = 'f32[16,32]{1,0:T(8,128)}', space=vmem, size = 0x2000, scoped, tag = 'scratch operand']
  %s0 = inlined_call_operand.vmem [shape: f32[16,32], index: 0, kind: input, shape index: {}]
  %s1 = inlined_call_operand.vmem [shape: f32[32,128], index: 1, kind: input, shape index: {}]
  %s2 = inlined_call_operand.vmem [shape: f32[64,32], index: 2, kind: input, shape index: {}]
  %s3 = inlined_call_operand.hbm [shape: f32[16,32], index: 3, kind: output, shape index: {}]
  %s4 = sld [smem:[#allocation0]]
  $region30: #{tpu_custom_call.1} parent=0
    _
  %s6 = ssub.s32 1, %s4
  %s7 = scalar_select 0, %s6, %s4
  $region1: #{tpu_custom_call.1} parent=0
    #allocation3 [shape = 'u8[8192]{0}', space=vmem, size = 0x2000, scoped, tag = 'output window, operand 0, single buffered']
    #allocation4 [shape = 's32[1]{0}', space=sflag, size = 0x4, scoped, tag = 'scoped memory for tpu_custom_call.1']
    %8 = vsyncpa [#allocation4], 0
    // Predicated region
    $region2: #{tpu_custom_call.1} parent=1 // pred_check
      _
    $region3: #{tpu_custom_call.1} parent=1 // pred_check_branch
      %10 = sbr.rel (0) target = $region5
    $region4: #{tpu_custom_call.1} parent=1 // pred_region
      _
    $region5: #{tpu_custom_call.1} parent=1 // pred_fallthru
      _
    // Predicated region
    $region6: #{tpu_custom_call.1} parent=1 // pred_check
      _
    $region7: #{tpu_custom_call.1} parent=1 // pred_check_branch
      %12 = sbr.rel (0) target = $region9
    $region8: #{tpu_custom_call.1} parent=1 // pred_region
      _
    $region9: #{tpu_custom_call.1} parent=1 // pred_fallthru
      _
    // Predicated region
    $region10: #{tpu_custom_call.1} parent=1 // pred_check
      _
    $region11: #{tpu_custom_call.1} parent=1 // pred_check_branch
      %14 = sbr.rel (0) target = $region13
    $region12: #{tpu_custom_call.1} parent=1 // pred_region
      _
    $region13: #{tpu_custom_call.1} parent=1 // pred_fallthru
      _
    %p15 = scmp.eq.s32.totalorder 0, 0
    // Predicated region
    $region14: #{tpu_custom_call.1} parent=1 // pred_check
      %p16 = pneg %p15
    $region15: #{tpu_custom_call.1} parent=1 // pred_check_branch
      %18 = sbr.rel (%p16) target = $region17
    $region16: #{tpu_custom_call.1} parent=1 // pred_region
      %vm19 = vcmask 261120
      %20 = vst.msk [vmem:[#allocation2] sm:$0xff] %vm19, 0.0
      %21 = vst.msk [vmem:[#allocation2 + $0x8] sm:$0xff] %vm19, 0.0
    $region17: #{tpu_custom_call.1} parent=1 // pred_fallthru
      _
    %v22 = vld [vmem:[%s0] sm:$0xff]
    %v23 = vld [vmem:[%s0 + $0x8] sm:$0xff]
    %v24 = vld [vmem:[%s1] sm:$0xff]
    %v25 = vld [vmem:[%s1 + $0x8] sm:$0xff]
    %v26 = vld [vmem:[%s1 + $0x10] sm:$0xff]
    %v27 = vld [vmem:[%s1 + $0x18] sm:$0xff]
    %vm28 = vcmask 261120
    %v30 = vsel %vm28, %v22, 0
    %v33 = vsel %vm28, %v23, 0
    %35 = vmatpush.msra.mxu0 0.0
    %36 = vmatpush.msra.mxu0 0.0
    %37 = vmatpush.msra.mxu0 0.0
    %38 = vmatpush.msra.mxu0 0.0
    %39 = vmatpush.msra.mxu0 0.0
    %40 = vmatpush.msra.mxu0 0.0
    %41 = vmatpush.msra.mxu0 0.0
    %42 = vmatpush.msra.mxu0 0.0
    %43 = vmatpush.msra.mxu0 0.0
    %44 = vmatpush.msra.mxu0 0.0
    %45 = vmatpush.msra.mxu0 0.0
    %46 = vmatpush.msra.mxu0 0.0
    %47 = vmatpush.msra.mxu0 %v27
    %48 = vmatpush.msra.mxu0 %v26
    %49 = vmatpush.msra.mxu0 %v25
    %50 = vmatpush.msra.mxu0 %v24
    %51 = vmatmul.f32.gmra.mxu0 %v30
    %v52 = vpop.f32.mrf.mxu0
    %v53 = vadd.f32 0.0, %v52
    %54 = vmatmul.f32.gmra.mxu0 %v33
    %v55 = vpop.f32.mrf.mxu0
    %v56 = vadd.f32 0.0, %v55
    %57 = vdwg.mxu0
    %v58 = vxor.u32 %v53, 2147483648
    %v59 = vxor.u32 %v56, 2147483648
    %v60 = vmul.f32 %v58, 1.442695
    %v61 = vpow.pop %v60
    %v62 = vmul.f32 %v59, 1.442695
    %v63 = vpow.pop %v62
    %v64 = vadd.f32 %v61, 1.0
    %v65 = vadd.f32 %v63, 1.0
    %v66 = vrcp.pop %v64
    %v67 = vmul.f32 %v64, %v66
    %v68 = vsub.f32 1.0, %v67
    %v69 = vmul.f32 %v66, %v68
    %v70 = vadd.f32 %v66, %v69
    %vm71 = vweird.f32 %v64
    %vm72 = vweird.f32 %v66
    %vm73 = vmor %vm71, %vm72
    %v74 = vsel %vm73, %v66, %v70
    %v75 = vand.u32 2147483647, %v64
    %vm76 = vcmp.eq.f32.partialorder %v75, 8.507059e+37
    %v77 = vand.u32 %v64, 2147483648
    %v78 = vor.u32 1.1754944e-38, %v77
    %v79 = vsel %vm76, %v78, %v74
    %v80 = vmul.f32 1.0, %v79
    %v81 = vrcp.pop %v65
    %v82 = vmul.f32 %v65, %v81
    %v83 = vsub.f32 1.0, %v82
    %v84 = vmul.f32 %v81, %v83
    %v85 = vadd.f32 %v81, %v84
    %vm86 = vweird.f32 %v65
    %vm87 = vweird.f32 %v81
    %vm88 = vmor %vm86, %vm87
    %v89 = vsel %vm88, %v81, %v85
    %v90 = vand.u32 2147483647, %v65
    %vm91 = vcmp.eq.f32.partialorder %v90, 8.507059e+37
    %v92 = vand.u32 %v65, 2147483648
    %v93 = vor.u32 1.1754944e-38, %v92
    %v94 = vsel %vm91, %v93, %v89
    %v95 = vmul.f32 1.0, %v94
    %v96 = vmul.f32 %v53, %v80
    %v97 = vmul.f32 %v56, %v95
    %100 = vrot.lane.b32.xlu0 %v53, 64
    %v101 = vpop.permute.xlu0 %100
    %102 = vrot.lane.b32.xlu0 %v56, 64
    %v103 = vpop.permute.xlu0 %102
    %v106 = vmul.f32 %v96, %v101
    %v107 = vmul.f32 %v97, %v103
    %v108 = vld [vmem:[#allocation2] sm:$0xff]
    %v109 = vld [vmem:[#allocation2 + $0x8] sm:$0xff]
    %v110 = vld [vmem:[%s2] sm:$0xff]
    %v111 = vld [vmem:[%s2 + $0x8] sm:$0xff]
    %v112 = vld [vmem:[%s2 + $0x10] sm:$0xff]
    %v113 = vld [vmem:[%s2 + $0x18] sm:$0xff]
    %v114 = vld [vmem:[%s2 + $0x20] sm:$0xff]
    %v115 = vld [vmem:[%s2 + $0x28] sm:$0xff]
    %v116 = vld [vmem:[%s2 + $0x30] sm:$0xff]
    %v117 = vld [vmem:[%s2 + $0x38] sm:$0xff]
    %vm118 = vcmask 523264
    %v120 = vsel %vm118, %v106, 0
    %v123 = vsel %vm118, %v107, 0
    %125 = vmatpush.msra.mxu0 0.0
    %126 = vmatpush.msra.mxu0 0.0
    %127 = vmatpush.msra.mxu0 0.0
    %128 = vmatpush.msra.mxu0 0.0
    %129 = vmatpush.msra.mxu0 0.0
    %130 = vmatpush.msra.mxu0 0.0
    %131 = vmatpush.msra.mxu0 0.0
    %132 = vmatpush.msra.mxu0 0.0
    %133 = vmatpush.msra.mxu0 %v117
    %134 = vmatpush.msra.mxu0 %v116
    %135 = vmatpush.msra.mxu0 %v115
    %136 = vmatpush.msra.mxu0 %v114
    %137 = vmatpush.msra.mxu0 %v113
    %138 = vmatpush.msra.mxu0 %v112
    %139 = vmatpush.msra.mxu0 %v111
    %140 = vmatpush.msra.mxu0 %v110
    %141 = vmatmul.f32.gmra.mxu0 %v120
    %v142 = vpop.f32.mrf.mxu0
    %v143 = vadd.f32 0.0, %v142
    %144 = vmatmul.f32.gmra.mxu0 %v123
    %v145 = vpop.f32.mrf.mxu0
    %v146 = vadd.f32 0.0, %v145
    %147 = vdwg.mxu0
    %v148 = vadd.f32 %v108, %v143
    %v149 = vadd.f32 %v109, %v146
    %150 = vst.msk [vmem:[#allocation2] sm:$0xff] %vm28, %v148
    %151 = vst.msk [vmem:[#allocation2 + $0x8] sm:$0xff] %vm28, %v149
    // Predicated region
    $region18: #{tpu_custom_call.1} parent=1 // pred_check
      %p152 = pneg %p15
    $region19: #{tpu_custom_call.1} parent=1 // pred_check_branch
      %154 = sbr.rel (%p152) target = $region21
    $region20: #{tpu_custom_call.1} parent=1 // pred_region
      %v155 = vld [vmem:[#allocation2] sm:$0xff]
      %v156 = vld [vmem:[#allocation2 + $0x8] sm:$0xff]
      %157 = vst.msk [vmem:[#allocation3] sm:$0xff] %vm28, %v155
      %158 = vst.msk [vmem:[#allocation3 + $0x8] sm:$0xff] %vm28, %v156
    $region21: #{tpu_custom_call.1} parent=1 // pred_fallthru
      _
    // Predicated region
    $region22: #{tpu_custom_call.1} parent=1 // pred_check
      _
    $region23: #{tpu_custom_call.1} parent=1 // pred_check_branch
      %160 = sbr.rel (0) target = $region25
    $region24: #{tpu_custom_call.1} parent=1 // pred_region
      %162 = vsyncadd [#allocation4], 0
      %s163 = sshll.u32 [#allocation3], 4
      %s164 = int_to_ptr.vmem [resolvable:$true] %s163
      %s165 = sshll.u32 %s3, 4
      %s166 = int_to_ptr.hbm [resolvable:$true] %s165
      %171 = dma.vmem_to_hbm [thread:$0]  %s164, 256, %s166, [#allocation4], 128, 128, 8
    $region25: #{tpu_custom_call.1} parent=1 // pred_fallthru
      _
    // Predicated region
    $region26: #{tpu_custom_call.1} parent=1 // pred_check
      _
    $region27: #{tpu_custom_call.1} parent=1 // pred_check_branch
      %173 = sbr.rel (0) target = $region29
    $region28: #{tpu_custom_call.1} parent=1 // pred_region
      %175 = dma.done [#allocation4], 256
    $region29: #{tpu_custom_call.1} parent=1 // pred_fallthru
      _
    %176 = vsyncpa [#allocation4], 1

</llo_original>
